<compile_context>
chip_gen: v7x
topology: tpu7x:2x2x1
jax: 0.10.0
libtpu: 0.0.40
codegen_flags: <defaults>
</compile_context>

<pallas_src>
import functools

import jax
import jax.numpy as jnp
from jax import lax
from jax.experimental import pallas as pl
from jax.experimental.pallas import tpu as pltpu

EPS = 1e-5
MXU_DTYPE = jnp.bfloat16   # bf16 operands, f32 accumulate (v5e/v6e/v7x MXU)
MM_ROW_TILE = 256          # matmul row tile (256-aligned for v6e/v7x MXU)
EW_ROW_TILE = 512          # elementwise row tile (lane-dense, mem-bound)


# --------------------------- Pallas kernels ---------------------------------

def _conv_mm_stats_kernel(a_ref, w_ref, b_ref, y_ref, s_ref, sq_ref,
                          *, m_true, tm):
    """y = A @ W + b (bf16 in, f32 acc) + per-tile partial BN stats."""
    y = (jnp.dot(a_ref[...], w_ref[...], preferred_element_type=jnp.float32)
         + b_ref[...])
    y_ref[...] = y
    if m_true is not None:
        # padded patch rows produce y == bias; mask them out of the stats
        row = (lax.broadcasted_iota(jnp.int32, y.shape, 0)
               + pl.program_id(0) * tm)
        y = jnp.where(row < m_true, y, 0.0)
    s_ref[...] = jnp.sum(y, axis=0, keepdims=True)
    sq_ref[...] = jnp.sum(y * y, axis=0, keepdims=True)


def _bn_act_kernel(x_ref, scale_ref, shift_ref, o_ref, *, alpha):
    """y = x*scale + shift ; LeakyReLU(alpha) (alpha=0 -> ReLU)."""
    y = x_ref[...] * scale_ref[...] + shift_ref[...]
    o_ref[...] = jnp.where(y >= 0, y, alpha * y)


def _bn_add_kernel(x_ref, skip_ref, scale_ref, shift_ref, o_ref):
    """Final BN affine fused with the residual add (no activation)."""
    o_ref[...] = x_ref[...] * scale_ref[...] + shift_ref[...] + skip_ref[...]


# --------------------------- helpers -----------------------------------------

def _choose_tile(rows, pref):
    """Row tile (multiple of 8 or full extent) + padded row count."""
    if rows >= pref:
        tile = pref
    else:
        tile = ((rows + 7) // 8) * 8
    padded = ((rows + tile - 1) // tile) * tile
    return tile, padded


def _lane_dense(x2d):
    """(M, C) -> (M*C/128, 128) row-major when C divides 128 (lane-dense)."""
    m, c = x2d.shape
    if c % 128 != 0 and 128 % c == 0 and (m * c) % 128 == 0:
        rep = 128 // c
        return x2d.reshape((m * c) // 128, 128), rep
    return x2d, 1


def _tile_vec(v, rep):
    return jnp.tile(v, (1, rep)) if rep > 1 else v


def im2col(x_nhwc, kh, kw, stride, pad):
    """Extract conv patches -> (N*Ho*Wo, kh*kw*C), ordered (i, j, c)."""
    n, h, w, c = x_nhwc.shape
    xp = jnp.pad(x_nhwc, ((0, 0), (pad, pad), (pad, pad), (0, 0)))
    ho = (h + 2 * pad - kh) // stride + 1
    wo = (w + 2 * pad - kw) // stride + 1
    cols = []
    for i in range(kh):
        for j in range(kw):
            cols.append(xp[:, i:i + stride * (ho - 1) + 1:stride,
                           j:j + stride * (wo - 1) + 1:stride, :])
    patches = jnp.concatenate(cols, axis=-1)            # (N, Ho, Wo, kh*kw*C)
    return patches.reshape(n * ho * wo, kh * kw * c), (n, ho, wo)


# --------------------------- Pallas wrappers ----------------------------------

def conv2d_stats(x_nhwc, w_oihw, bias, stride, pad):
    """Conv via im2col + Pallas matmul with fused per-channel sum/sumsq.

    Returns y (M, O) f32, partial sums s/sq (n_tiles, O), and output spatial
    shape.  Stats are per-grid-tile partials (final reduce is a tiny XLA op),
    so the M grid axis stays "parallel" (megacore-friendly on v7x).
    """
    o, ci, kh, kw = w_oihw.shape
    patches, (n, ho, wo) = im2col(x_nhwc.astype(MXU_DTYPE), kh, kw, stride, pad)
    m, k = patches.shape
    tm, mp = _choose_tile(m, MM_ROW_TILE)
    if mp != m:
        patches = jnp.pad(patches, ((0, mp - m), (0, 0)))
    n_tiles = mp // tm

    # PyTorch weight (O, I, kh, kw) -> (kh*kw*I, O) matching patch ordering
    w_flat = jnp.transpose(w_oihw, (2, 3, 1, 0)).reshape(k, o).astype(MXU_DTYPE)
    if bias is None:
        bias = jnp.zeros((o,), jnp.float32)
    bias = bias.reshape(1, o).astype(jnp.float32)

    kernel = functools.partial(_conv_mm_stats_kernel,
                               m_true=(m if mp != m else None), tm=tm)
    y, s, sq = pl.pallas_call(
        kernel,
        out_shape=(jax.ShapeDtypeStruct((mp, o), jnp.float32),
                   jax.ShapeDtypeStruct((n_tiles, o), jnp.float32),
                   jax.ShapeDtypeStruct((n_tiles, o), jnp.float32)),
        grid=(n_tiles,),
        in_specs=[pl.BlockSpec((tm, k), lambda i: (i, 0)),
                  pl.BlockSpec((k, o), lambda i: (0, 0)),   # weight VMEM-resident
                  pl.BlockSpec((1, o), lambda i: (0, 0))],
        out_specs=(pl.BlockSpec((tm, o), lambda i: (i, 0)),
                   pl.BlockSpec((1, o), lambda i: (i, 0)),
                   pl.BlockSpec((1, o), lambda i: (i, 0))),
        compiler_params=pltpu.CompilerParams(
            dimension_semantics=("parallel",)),
    )(patches, w_flat, bias)
    return y[:m], s, sq, (n, ho, wo)


def finalize_stats(s, sq, m_true):
    """Biased batch mean/var from per-tile partial sums (tiny XLA reduce)."""
    mean = jnp.sum(s, axis=0, keepdims=True) / m_true
    var = jnp.sum(sq, axis=0, keepdims=True) / m_true - mean * mean
    var = jnp.maximum(var, 0.0)          # guard against f32 cancellation
    return mean, var


def bn_scale_shift(gamma, beta, mean, var):
    scale = gamma.reshape(1, -1) * lax.rsqrt(var + EPS)
    shift = beta.reshape(1, -1) - mean * scale
    return scale, shift


def bn_act(y2d, scale, shift, alpha):
    """BatchNorm affine + LeakyReLU(alpha), lane-dense layout, in Pallas."""
    m, c = y2d.shape
    yd, rep = _lane_dense(y2d)
    sc, sh = _tile_vec(scale, rep), _tile_vec(shift, rep)
    r, l = yd.shape
    tile, rp = _choose_tile(r, EW_ROW_TILE)
    if rp != r:
        yd = jnp.pad(yd, ((0, rp - r), (0, 0)))
    out = pl.pallas_call(
        functools.partial(_bn_act_kernel, alpha=alpha),
        out_shape=jax.ShapeDtypeStruct((rp, l), jnp.float32),
        grid=(rp // tile,),
        in_specs=[pl.BlockSpec((tile, l), lambda i: (i, 0)),
                  pl.BlockSpec((1, l), lambda i: (0, 0)),
                  pl.BlockSpec((1, l), lambda i: (0, 0))],
        out_specs=pl.BlockSpec((tile, l), lambda i: (i, 0)),
        compiler_params=pltpu.CompilerParams(
            dimension_semantics=("parallel",)),
    )(yd, sc, sh)
    return out[:r].reshape(m, c)


def bn_add_residual(z2d, skip2d, scale, shift):
    """Final BatchNorm affine fused with the residual add (Pallas)."""
    m, c = z2d.shape
    zd, rep = _lane_dense(z2d)
    sd, _ = _lane_dense(skip2d)
    sc, sh = _tile_vec(scale, rep), _tile_vec(shift, rep)
    r, l = zd.shape
    tile, rp = _choose_tile(r, EW_ROW_TILE)
    if rp != r:
        zd = jnp.pad(zd, ((0, rp - r), (0, 0)))
        sd = jnp.pad(sd, ((0, rp - r), (0, 0)))
    out = pl.pallas_call(
        _bn_add_kernel,
        out_shape=jax.ShapeDtypeStruct((rp, l), jnp.float32),
        grid=(rp // tile,),
        in_specs=[pl.BlockSpec((tile, l), lambda i: (i, 0)),
                  pl.BlockSpec((tile, l), lambda i: (i, 0)),
                  pl.BlockSpec((1, l), lambda i: (0, 0)),
                  pl.BlockSpec((1, l), lambda i: (0, 0))],
        out_specs=pl.BlockSpec((tile, l), lambda i: (i, 0)),
        compiler_params=pltpu.CompilerParams(
            dimension_semantics=("parallel",)),
    )(zd, sd, sc, sh)
    return out[:r].reshape(m, c)


# ----------------------------- forward ---------------------------------------

def unet_down_forward(x_nchw, p):
    x = jnp.transpose(x_nchw, (0, 2, 3, 1)).astype(jnp.float32)  # NCHW -> NHWC
    c_out = p["w0"].shape[0]

    # --- Conv2d(in, out, 4, stride=2, pad=1, bias=False) + BN + LeakyReLU(0.2)
    y, s, sq, (n, ho, wo) = conv2d_stats(x, p["w0"], None, 2, 1)
    m_rows = n * ho * wo
    mean, var = finalize_stats(s, sq, m_rows)
    scale, shift = bn_scale_shift(p["g0"], p["b0"], mean, var)
    y = bn_act(y, scale, shift, alpha=0.2)

    # --- ResidualBlock: conv3x3 -> BN -> ReLU -> conv3x3 -> BN ; + skip
    skip = y
    z, s, sq, _ = conv2d_stats(y.reshape(n, ho, wo, c_out), p["w1"],
                               p["bias1"], 1, 1)
    mean, var = finalize_stats(s, sq, m_rows)
    scale, shift = bn_scale_shift(p["g1"], p["b1"], mean, var)
    z = bn_act(z, scale, shift, alpha=0.0)                       # ReLU

    z, s, sq, _ = conv2d_stats(z.reshape(n, ho, wo, c_out), p["w2"],
                               p["bias2"], 1, 1)
    mean, var = finalize_stats(s, sq, m_rows)
    scale, shift = bn_scale_shift(p["g2"], p["b2"], mean, var)
    out = bn_add_residual(z, skip, scale, shift)                 # BN + skip add

    out = out.reshape(n, ho, wo, c_out)
    return jnp.transpose(out, (0, 3, 1, 2))                      # back to NCHW


def init_params(key, in_size, out_size):
    ks = jax.random.split(key, 5)
    f32 = jnp.float32
    return {
        # UNetDown conv (no bias)
        "w0": 0.1 * jax.random.normal(ks[0], (out_size, in_size, 4, 4), f32),
        "g0": jnp.ones((out_size,), f32), "b0": jnp.zeros((out_size,), f32),
        # ResidualBlock conv1 / BN1
        "w1": 0.1 * jax.random.normal(ks[1], (out_size, out_size, 3, 3), f32),
        "bias1": 0.1 * jax.random.normal(ks[2], (out_size,), f32),
        "g1": jnp.ones((out_size,), f32), "b1": jnp.zeros((out_size,), f32),
        # ResidualBlock conv2 / BN2
        "w2": 0.1 * jax.random.normal(ks[3], (out_size, out_size, 3, 3), f32),
        "bias2": 0.1 * jax.random.normal(ks[4], (out_size,), f32),
        "g2": jnp.ones((out_size,), f32), "b2": jnp.zeros((out_size,), f32),
    }


if __name__ == "__main__":
    key = jax.random.PRNGKey(0)
    kx, kp = jax.random.split(key)

    in_size, out_size = 4, 8
    x = jax.random.normal(kx, (2, in_size, 16, 16), jnp.float32)   # NCHW input
    params = init_params(kp, in_size, out_size)

    out = jax.jit(unet_down_forward)(x, params)
    out = jax.block_until_ready(out)

    assert out.shape == (2, out_size, 8, 8), out.shape
    assert jnp.all(jnp.isfinite(out))
    print("KERNEL_OK")
</pallas_src>

<mosaic_0001>
module attributes {stable_mosaic.version = 11 : i64} {
  func.func @_conv_mm_stats_kernel(%arg0: i32, %arg1: memref<128x64xbf16, #tpu.memory_space<vmem>>, %arg2: memref<64x8xbf16, #tpu.memory_space<vmem>>, %arg3: memref<1x8xf32, #tpu.memory_space<vmem>>, %arg4: memref<128x8xf32, #tpu.memory_space<vmem>>, %arg5: memref<1x8xf32, #tpu.memory_space<vmem>>, %arg6: memref<1x8xf32, #tpu.memory_space<vmem>>) attributes {dimension_semantics = [#tpu.dimension_semantics<parallel>], iteration_bounds = array<i64: 1>, scalar_prefetch = 0 : i64, scratch_operands = 0 : i64, tpu.core_type = #tpu.core_type<tc>, window_params = [{transform_indices = @transform_0, window_bounds = array<i64: 128, 64>}, {pipeline_mode = #tpu.pipeline_mode<synchronous>, transform_indices = @transform_1, window_bounds = array<i64: 64, 8>}, {pipeline_mode = #tpu.pipeline_mode<synchronous>, transform_indices = @transform_2, window_bounds = array<i64: 1, 8>}, {transform_indices = @transform_3, window_bounds = array<i64: 128, 8>}, {transform_indices = @transform_4, window_bounds = array<i64: 1, 8>}, {transform_indices = @transform_5, window_bounds = array<i64: 1, 8>}]} {
    %c0 = arith.constant 0 : index
    %c0_0 = arith.constant 0 : index
    %0 = vector.load %arg1[%c0, %c0_0] : memref<128x64xbf16, #tpu.memory_space<vmem>>, vector<128x64xbf16>
    %c0_1 = arith.constant 0 : index
    %c0_2 = arith.constant 0 : index
    %1 = vector.load %arg2[%c0_1, %c0_2] : memref<64x8xbf16, #tpu.memory_space<vmem>>, vector<64x8xbf16>
    %cst = arith.constant dense<0.000000e+00> : vector<128x8xf32>
    %2 = tpu.matmul %0, %1, %cst {dimension_numbers = #tpu.dot_dimension_numbers<[1], [0], [0], [1], [0, 0, 1, 1], [], []>} : vector<128x64xbf16>, vector<64x8xbf16>, vector<128x8xf32> -> vector<128x8xf32>
    %c0_3 = arith.constant 0 : index
    %c0_4 = arith.constant 0 : index
    %3 = vector.load %arg3[%c0_3, %c0_4] : memref<1x8xf32, #tpu.memory_space<vmem>>, vector<1x8xf32>
    %4 = vector.broadcast %3 : vector<1x8xf32> to vector<128x8xf32>
    %5 = arith.addf %2, %4 : vector<128x8xf32>
    %c0_5 = arith.constant 0 : index
    %c0_6 = arith.constant 0 : index
    %6 = vector.load %arg4[%c0_5, %c0_6] : memref<128x8xf32, #tpu.memory_space<vmem>>, vector<128x8xf32>
    tpu.vector_store %arg4[%c0_5, %c0_6], %5 {strides = array<i32>} : memref<128x8xf32, #tpu.memory_space<vmem>>, vector<128x8xf32>,
    %cst_7 = arith.constant dense<0.000000e+00> : vector<8xf32>
    %7 = vector.multi_reduction <add>, %5, %cst_7 [0] : vector<128x8xf32> to vector<8xf32>
    %8 = vector.shape_cast %7 : vector<8xf32> to vector<1x8xf32>
    %c0_8 = arith.constant 0 : index
    %c0_9 = arith.constant 0 : index
    %9 = vector.load %arg5[%c0_8, %c0_9] : memref<1x8xf32, #tpu.memory_space<vmem>>, vector<1x8xf32>
    tpu.vector_store %arg5[%c0_8, %c0_9], %8 {strides = array<i32>} : memref<1x8xf32, #tpu.memory_space<vmem>>, vector<1x8xf32>,
    %10 = arith.mulf %5, %5 : vector<128x8xf32>
    %cst_10 = arith.constant dense<0.000000e+00> : vector<8xf32>
    %11 = vector.multi_reduction <add>, %10, %cst_10 [0] : vector<128x8xf32> to vector<8xf32>
    %12 = vector.shape_cast %11 : vector<8xf32> to vector<1x8xf32>
    %c0_11 = arith.constant 0 : index
    %c0_12 = arith.constant 0 : index
    %13 = vector.load %arg6[%c0_11, %c0_12] : memref<1x8xf32, #tpu.memory_space<vmem>>, vector<1x8xf32>
    tpu.vector_store %arg6[%c0_11, %c0_12], %12 {strides = array<i32>} : memref<1x8xf32, #tpu.memory_space<vmem>>, vector<1x8xf32>,
    return
  }
  func.func @transform_0(%arg0: i32) -> (i32, i32) {
    %c0_i32 = arith.constant 0 : i32
    %c0_i32_0 = arith.constant 0 : i32
    return %arg0, %c0_i32 : i32, i32
  }
  func.func @transform_1(%arg0: i32) -> (i32, i32) {
    %c0_i32 = arith.constant 0 : i32
    %c0_i32_0 = arith.constant 0 : i32
    %c0_i32_1 = arith.constant 0 : i32
    return %c0_i32, %c0_i32_0 : i32, i32
  }
  func.func @transform_2(%arg0: i32) -> (i32, i32) {
    %c0_i32 = arith.constant 0 : i32
    %c0_i32_0 = arith.constant 0 : i32
    %c0_i32_1 = arith.constant 0 : i32
    return %c0_i32, %c0_i32_0 : i32, i32
  }
  func.func @transform_3(%arg0: i32) -> (i32, i32) {
    %c0_i32 = arith.constant 0 : i32
    %c0_i32_0 = arith.constant 0 : i32
    return %arg0, %c0_i32 : i32, i32
  }
  func.func @transform_4(%arg0: i32) -> (i32, i32) {
    %c0_i32 = arith.constant 0 : i32
    %c0_i32_0 = arith.constant 0 : i32
    return %arg0, %c0_i32 : i32, i32
  }
  func.func @transform_5(%arg0: i32) -> (i32, i32) {
    %c0_i32 = arith.constant 0 : i32
    %c0_i32_0 = arith.constant 0 : i32
    return %arg0, %c0_i32 : i32, i32
  }
}

module attributes {stable_mosaic.version = 11 : i64} {
  func.func @_bn_act_kernel(%arg0: i32, %arg1: memref<8x128xf32, #tpu.memory_space<vmem>>, %arg2: memref<1x128xf32, #tpu.memory_space<vmem>>, %arg3: memref<1x128xf32, #tpu.memory_space<vmem>>, %arg4: memref<8x128xf32, #tpu.memory_space<vmem>>) attributes {dimension_semantics = [#tpu.dimension_semantics<parallel>], iteration_bounds = array<i64: 1>, scalar_prefetch = 0 : i64, scratch_operands = 0 : i64, tpu.core_type = #tpu.core_type<tc>, window_params = [{transform_indices = @transform_0, window_bounds = array<i64: 8, 128>}, {pipeline_mode = #tpu.pipeline_mode<synchronous>, transform_indices = @transform_1, window_bounds = array<i64: 1, 128>}, {pipeline_mode = #tpu.pipeline_mode<synchronous>, transform_indices = @transform_2, window_bounds = array<i64: 1, 128>}, {transform_indices = @transform_3, window_bounds = array<i64: 8, 128>}]} {
    %c0 = arith.constant 0 : index
    %c0_0 = arith.constant 0 : index
    %0 = vector.load %arg1[%c0, %c0_0] : memref<8x128xf32, #tpu.memory_space<vmem>>, vector<8x128xf32>
    %c0_1 = arith.constant 0 : index
    %c0_2 = arith.constant 0 : index
    %1 = vector.load %arg2[%c0_1, %c0_2] : memref<1x128xf32, #tpu.memory_space<vmem>>, vector<1x128xf32>
    %2 = vector.broadcast %1 : vector<1x128xf32> to vector<8x128xf32>
    %3 = arith.mulf %0, %2 : vector<8x128xf32>
    %c0_3 = arith.constant 0 : index
    %c0_4 = arith.constant 0 : index
    %4 = vector.load %arg3[%c0_3, %c0_4] : memref<1x128xf32, #tpu.memory_space<vmem>>, vector<1x128xf32>
    %5 = vector.broadcast %4 : vector<1x128xf32> to vector<8x128xf32>
    %6 = arith.addf %3, %5 : vector<8x128xf32>
    %cst = arith.constant 0.000000e+00 : f32
    %7 = vector.broadcast %cst : f32 to vector<8x128xf32>
    %8 = arith.cmpf oge, %6, %7 : vector<8x128xf32>
    %cst_5 = arith.constant 2.000000e-01 : f32
    %9 = vector.broadcast %cst_5 : f32 to vector<8x128xf32>
    %10 = arith.mulf %9, %6 : vector<8x128xf32>
    %11 = arith.select %8, %6, %10 : vector<8x128xi1>, vector<8x128xf32>
    %c0_6 = arith.constant 0 : index
    %c0_7 = arith.constant 0 : index
    %12 = vector.load %arg4[%c0_6, %c0_7] : memref<8x128xf32, #tpu.memory_space<vmem>>, vector<8x128xf32>
    tpu.vector_store %arg4[%c0_6, %c0_7], %11 {strides = array<i32>} : memref<8x128xf32, #tpu.memory_space<vmem>>, vector<8x128xf32>,
    return
  }
  func.func @transform_0(%arg0: i32) -> (i32, i32) {
    %c0_i32 = arith.constant 0 : i32
    %c0_i32_0 = arith.constant 0 : i32
    return %arg0, %c0_i32 : i32, i32
  }
  func.func @transform_1(%arg0: i32) -> (i32, i32) {
    %c0_i32 = arith.constant 0 : i32
    %c0_i32_0 = arith.constant 0 : i32
    %c0_i32_1 = arith.constant 0 : i32
    return %c0_i32, %c0_i32_0 : i32, i32
  }
  func.func @transform_2(%arg0: i32) -> (i32, i32) {
    %c0_i32 = arith.constant 0 : i32
    %c0_i32_0 = arith.constant 0 : i32
    %c0_i32_1 = arith.constant 0 : i32
    return %c0_i32, %c0_i32_0 : i32, i32
  }
  func.func @transform_3(%arg0: i32) -> (i32, i32) {
    %c0_i32 = arith.constant 0 : i32
    %c0_i32_0 = arith.constant 0 : i32
    return %arg0, %c0_i32 : i32, i32
  }
}

module attributes {stable_mosaic.version = 11 : i64} {
  func.func @_conv_mm_stats_kernel(%arg0: i32, %arg1: memref<128x72xbf16, #tpu.memory_space<vmem>>, %arg2: memref<72x8xbf16, #tpu.memory_space<vmem>>, %arg3: memref<1x8xf32, #tpu.memory_space<vmem>>, %arg4: memref<128x8xf32, #tpu.memory_space<vmem>>, %arg5: memref<1x8xf32, #tpu.memory_space<vmem>>, %arg6: memref<1x8xf32, #tpu.memory_space<vmem>>) attributes {dimension_semantics = [#tpu.dimension_semantics<parallel>], iteration_bounds = array<i64: 1>, scalar_prefetch = 0 : i64, scratch_operands = 0 : i64, tpu.core_type = #tpu.core_type<tc>, window_params = [{transform_indices = @transform_0, window_bounds = array<i64: 128, 72>}, {pipeline_mode = #tpu.pipeline_mode<synchronous>, transform_indices = @transform_1, window_bounds = array<i64: 72, 8>}, {pipeline_mode = #tpu.pipeline_mode<synchronous>, transform_indices = @transform_2, window_bounds = array<i64: 1, 8>}, {transform_indices = @transform_3, window_bounds = array<i64: 128, 8>}, {transform_indices = @transform_4, window_bounds = array<i64: 1, 8>}, {transform_indices = @transform_5, window_bounds = array<i64: 1, 8>}]} {
    %c0 = arith.constant 0 : index
    %c0_0 = arith.constant 0 : index
    %0 = vector.load %arg1[%c0, %c0_0] : memref<128x72xbf16, #tpu.memory_space<vmem>>, vector<128x72xbf16>
    %c0_1 = arith.constant 0 : index
    %c0_2 = arith.constant 0 : index
    %1 = vector.load %arg2[%c0_1, %c0_2] : memref<72x8xbf16, #tpu.memory_space<vmem>>, vector<72x8xbf16>
    %cst = arith.constant dense<0.000000e+00> : vector<128x8xf32>
    %2 = tpu.matmul %0, %1, %cst {dimension_numbers = #tpu.dot_dimension_numbers<[1], [0], [0], [1], [0, 0, 1, 1], [], []>} : vector<128x72xbf16>, vector<72x8xbf16>, vector<128x8xf32> -> vector<128x8xf32>
    %c0_3 = arith.constant 0 : index
    %c0_4 = arith.constant 0 : index
    %3 = vector.load %arg3[%c0_3, %c0_4] : memref<1x8xf32, #tpu.memory_space<vmem>>, vector<1x8xf32>
    %4 = vector.broadcast %3 : vector<1x8xf32> to vector<128x8xf32>
    %5 = arith.addf %2, %4 : vector<128x8xf32>
    %c0_5 = arith.constant 0 : index
    %c0_6 = arith.constant 0 : index
    %6 = vector.load %arg4[%c0_5, %c0_6] : memref<128x8xf32, #tpu.memory_space<vmem>>, vector<128x8xf32>
    tpu.vector_store %arg4[%c0_5, %c0_6], %5 {strides = array<i32>} : memref<128x8xf32, #tpu.memory_space<vmem>>, vector<128x8xf32>,
    %cst_7 = arith.constant dense<0.000000e+00> : vector<8xf32>
    %7 = vector.multi_reduction <add>, %5, %cst_7 [0] : vector<128x8xf32> to vector<8xf32>
    %8 = vector.shape_cast %7 : vector<8xf32> to vector<1x8xf32>
    %c0_8 = arith.constant 0 : index
    %c0_9 = arith.constant 0 : index
    %9 = vector.load %arg5[%c0_8, %c0_9] : memref<1x8xf32, #tpu.memory_space<vmem>>, vector<1x8xf32>
    tpu.vector_store %arg5[%c0_8, %c0_9], %8 {strides = array<i32>} : memref<1x8xf32, #tpu.memory_space<vmem>>, vector<1x8xf32>,
    %10 = arith.mulf %5, %5 : vector<128x8xf32>
    %cst_10 = arith.constant dense<0.000000e+00> : vector<8xf32>
    %11 = vector.multi_reduction <add>, %10, %cst_10 [0] : vector<128x8xf32> to vector<8xf32>
    %12 = vector.shape_cast %11 : vector<8xf32> to vector<1x8xf32>
    %c0_11 = arith.constant 0 : index
    %c0_12 = arith.constant 0 : index
    %13 = vector.load %arg6[%c0_11, %c0_12] : memref<1x8xf32, #tpu.memory_space<vmem>>, vector<1x8xf32>
    tpu.vector_store %arg6[%c0_11, %c0_12], %12 {strides = array<i32>} : memref<1x8xf32, #tpu.memory_space<vmem>>, vector<1x8xf32>,
    return
  }
  func.func @transform_0(%arg0: i32) -> (i32, i32) {
    %c0_i32 = arith.constant 0 : i32
    %c0_i32_0 = arith.constant 0 : i32
    return %arg0, %c0_i32 : i32, i32
  }
  func.func @transform_1(%arg0: i32) -> (i32, i32) {
    %c0_i32 = arith.constant 0 : i32
    %c0_i32_0 = arith.constant 0 : i32
    %c0_i32_1 = arith.constant 0 : i32
    return %c0_i32, %c0_i32_0 : i32, i32
  }
  func.func @transform_2(%arg0: i32) -> (i32, i32) {
    %c0_i32 = arith.constant 0 : i32
    %c0_i32_0 = arith.constant 0 : i32
    %c0_i32_1 = arith.constant 0 : i32
    return %c0_i32, %c0_i32_0 : i32, i32
  }
  func.func @transform_3(%arg0: i32) -> (i32, i32) {
    %c0_i32 = arith.constant 0 : i32
    %c0_i32_0 = arith.constant 0 : i32
    return %arg0, %c0_i32 : i32, i32
  }
  func.func @transform_4(%arg0: i32) -> (i32, i32) {
    %c0_i32 = arith.constant 0 : i32
    %c0_i32_0 = arith.constant 0 : i32
    return %arg0, %c0_i32 : i32, i32
  }
  func.func @transform_5(%arg0: i32) -> (i32, i32) {
    %c0_i32 = arith.constant 0 : i32
    %c0_i32_0 = arith.constant 0 : i32
    return %arg0, %c0_i32 : i32, i32
  }
}

module attributes {stable_mosaic.version = 11 : i64} {
  func.func @_bn_act_kernel(%arg0: i32, %arg1: memref<8x128xf32, #tpu.memory_space<vmem>>, %arg2: memref<1x128xf32, #tpu.memory_space<vmem>>, %arg3: memref<1x128xf32, #tpu.memory_space<vmem>>, %arg4: memref<8x128xf32, #tpu.memory_space<vmem>>) attributes {dimension_semantics = [#tpu.dimension_semantics<parallel>], iteration_bounds = array<i64: 1>, scalar_prefetch = 0 : i64, scratch_operands = 0 : i64, tpu.core_type = #tpu.core_type<tc>, window_params = [{transform_indices = @transform_0, window_bounds = array<i64: 8, 128>}, {pipeline_mode = #tpu.pipeline_mode<synchronous>, transform_indices = @transform_1, window_bounds = array<i64: 1, 128>}, {pipeline_mode = #tpu.pipeline_mode<synchronous>, transform_indices = @transform_2, window_bounds = array<i64: 1, 128>}, {transform_indices = @transform_3, window_bounds = array<i64: 8, 128>}]} {
    %c0 = arith.constant 0 : index
    %c0_0 = arith.constant 0 : index
    %0 = vector.load %arg1[%c0, %c0_0] : memref<8x128xf32, #tpu.memory_space<vmem>>, vector<8x128xf32>
    %c0_1 = arith.constant 0 : index
    %c0_2 = arith.constant 0 : index
    %1 = vector.load %arg2[%c0_1, %c0_2] : memref<1x128xf32, #tpu.memory_space<vmem>>, vector<1x128xf32>
    %2 = vector.broadcast %1 : vector<1x128xf32> to vector<8x128xf32>
    %3 = arith.mulf %0, %2 : vector<8x128xf32>
    %c0_3 = arith.constant 0 : index
    %c0_4 = arith.constant 0 : index
    %4 = vector.load %arg3[%c0_3, %c0_4] : memref<1x128xf32, #tpu.memory_space<vmem>>, vector<1x128xf32>
    %5 = vector.broadcast %4 : vector<1x128xf32> to vector<8x128xf32>
    %6 = arith.addf %3, %5 : vector<8x128xf32>
    %cst = arith.constant 0.000000e+00 : f32
    %7 = vector.broadcast %cst : f32 to vector<8x128xf32>
    %8 = arith.cmpf oge, %6, %7 : vector<8x128xf32>
    %cst_5 = arith.constant 0.000000e+00 : f32
    %9 = vector.broadcast %cst_5 : f32 to vector<8x128xf32>
    %10 = arith.mulf %9, %6 : vector<8x128xf32>
    %11 = arith.select %8, %6, %10 : vector<8x128xi1>, vector<8x128xf32>
    %c0_6 = arith.constant 0 : index
    %c0_7 = arith.constant 0 : index
    %12 = vector.load %arg4[%c0_6, %c0_7] : memref<8x128xf32, #tpu.memory_space<vmem>>, vector<8x128xf32>
    tpu.vector_store %arg4[%c0_6, %c0_7], %11 {strides = array<i32>} : memref<8x128xf32, #tpu.memory_space<vmem>>, vector<8x128xf32>,
    return
  }
  func.func @transform_0(%arg0: i32) -> (i32, i32) {
    %c0_i32 = arith.constant 0 : i32
    %c0_i32_0 = arith.constant 0 : i32
    return %arg0, %c0_i32 : i32, i32
  }
  func.func @transform_1(%arg0: i32) -> (i32, i32) {
    %c0_i32 = arith.constant 0 : i32
    %c0_i32_0 = arith.constant 0 : i32
    %c0_i32_1 = arith.constant 0 : i32
    return %c0_i32, %c0_i32_0 : i32, i32
  }
  func.func @transform_2(%arg0: i32) -> (i32, i32) {
    %c0_i32 = arith.constant 0 : i32
    %c0_i32_0 = arith.constant 0 : i32
    %c0_i32_1 = arith.constant 0 : i32
    return %c0_i32, %c0_i32_0 : i32, i32
  }
  func.func @transform_3(%arg0: i32) -> (i32, i32) {
    %c0_i32 = arith.constant 0 : i32
    %c0_i32_0 = arith.constant 0 : i32
    return %arg0, %c0_i32 : i32, i32
  }
}

module attributes {stable_mosaic.version = 11 : i64} {
  func.func @_bn_add_kernel(%arg0: i32, %arg1: memref<8x128xf32, #tpu.memory_space<vmem>>, %arg2: memref<8x128xf32, #tpu.memory_space<vmem>>, %arg3: memref<1x128xf32, #tpu.memory_space<vmem>>, %arg4: memref<1x128xf32, #tpu.memory_space<vmem>>, %arg5: memref<8x128xf32, #tpu.memory_space<vmem>>) attributes {dimension_semantics = [#tpu.dimension_semantics<parallel>], iteration_bounds = array<i64: 1>, scalar_prefetch = 0 : i64, scratch_operands = 0 : i64, tpu.core_type = #tpu.core_type<tc>, window_params = [{transform_indices = @transform_0, window_bounds = array<i64: 8, 128>}, {transform_indices = @transform_1, window_bounds = array<i64: 8, 128>}, {pipeline_mode = #tpu.pipeline_mode<synchronous>, transform_indices = @transform_2, window_bounds = array<i64: 1, 128>}, {pipeline_mode = #tpu.pipeline_mode<synchronous>, transform_indices = @transform_3, window_bounds = array<i64: 1, 128>}, {transform_indices = @transform_4, window_bounds = array<i64: 8, 128>}]} {
    %c0 = arith.constant 0 : index
    %c0_0 = arith.constant 0 : index
    %0 = vector.load %arg1[%c0, %c0_0] : memref<8x128xf32, #tpu.memory_space<vmem>>, vector<8x128xf32>
    %c0_1 = arith.constant 0 : index
    %c0_2 = arith.constant 0 : index
    %1 = vector.load %arg3[%c0_1, %c0_2] : memref<1x128xf32, #tpu.memory_space<vmem>>, vector<1x128xf32>
    %2 = vector.broadcast %1 : vector<1x128xf32> to vector<8x128xf32>
    %3 = arith.mulf %0, %2 : vector<8x128xf32>
    %c0_3 = arith.constant 0 : index
    %c0_4 = arith.constant 0 : index
    %4 = vector.load %arg4[%c0_3, %c0_4] : memref<1x128xf32, #tpu.memory_space<vmem>>, vector<1x128xf32>
    %5 = vector.broadcast %4 : vector<1x128xf32> to vector<8x128xf32>
    %6 = arith.addf %3, %5 : vector<8x128xf32>
    %c0_5 = arith.constant 0 : index
    %c0_6 = arith.constant 0 : index
    %7 = vector.load %arg2[%c0_5, %c0_6] : memref<8x128xf32, #tpu.memory_space<vmem>>, vector<8x128xf32>
    %8 = arith.addf %6, %7 : vector<8x128xf32>
    %c0_7 = arith.constant 0 : index
    %c0_8 = arith.constant 0 : index
    %9 = vector.load %arg5[%c0_7, %c0_8] : memref<8x128xf32, #tpu.memory_space<vmem>>, vector<8x128xf32>
    tpu.vector_store %arg5[%c0_7, %c0_8], %8 {strides = array<i32>} : memref<8x128xf32, #tpu.memory_space<vmem>>, vector<8x128xf32>,
    return
  }
  func.func @transform_0(%arg0: i32) -> (i32, i32) {
    %c0_i32 = arith.constant 0 : i32
    %c0_i32_0 = arith.constant 0 : i32
    return %arg0, %c0_i32 : i32, i32
  }
  func.func @transform_1(%arg0: i32) -> (i32, i32) {
    %c0_i32 = arith.constant 0 : i32
    %c0_i32_0 = arith.constant 0 : i32
    return %arg0, %c0_i32 : i32, i32
  }
  func.func @transform_2(%arg0: i32) -> (i32, i32) {
    %c0_i32 = arith.constant 0 : i32
    %c0_i32_0 = arith.constant 0 : i32
    %c0_i32_1 = arith.constant 0 : i32
    return %c0_i32, %c0_i32_0 : i32, i32
  }
  func.func @transform_3(%arg0: i32) -> (i32, i32) {
    %c0_i32 = arith.constant 0 : i32
    %c0_i32_0 = arith.constant 0 : i32
    %c0_i32_1 = arith.constant 0 : i32
    return %c0_i32, %c0_i32_0 : i32, i32
  }
  func.func @transform_4(%arg0: i32) -> (i32, i32) {
    %c0_i32 = arith.constant 0 : i32
    %c0_i32_0 = arith.constant 0 : i32
    return %arg0, %c0_i32 : i32, i32
  }
}

</mosaic_0001>

<llo_original>
// kernel: unet_down_forward.7
$region0: #{unet_down_forward.7}
  #allocation0 [shape = 'u32[]', space=smem, size = 0x4, offset = 0x4, fixed_abs, tag = 'smem constant byte address 0x4 - core index']
  #allocation1 [shape = 'u32[144,128]{1,0:T(1,128)}', space=vmem, size = 0x12000, scoped, tag = 'internal scratch']
  %s0 = inlined_call_operand.vmem [shape: f32[8,128], index: 0, kind: input, shape index: {}]
  %s1 = inlined_call_operand.vmem [shape: f32[1,128], index: 1, kind: input, shape index: {}]
  %s2 = inlined_call_operand.vmem [shape: f32[1,128], index: 2, kind: input, shape index: {}]
  %s3 = inlined_call_operand.vmem [shape: f32[8,128], index: 3, kind: output, shape index: {}]
  %s4 = sld [smem:[#allocation0]]
  $region22: #{unet_down_forward.7} parent=0
    _
  %s6 = ssub.s32 1, %s4
  %s7 = scalar_select 0, %s6, %s4
  // Predicated region
  $region2: #{unet_down_forward.7} parent=0 // pred_check
    _
  $region3: #{unet_down_forward.7} parent=0 // pred_check_branch
    %9 = sbr.rel (0) target = $region5
  $region4: #{unet_down_forward.7} parent=0 // pred_region
    _
  $region5: #{unet_down_forward.7} parent=0 // pred_fallthru
    _
  // Predicated region
  $region6: #{unet_down_forward.7} parent=0 // pred_check
    _
  $region7: #{unet_down_forward.7} parent=0 // pred_check_branch
    %11 = sbr.rel (0) target = $region9
  $region8: #{unet_down_forward.7} parent=0 // pred_region
    _
  $region9: #{unet_down_forward.7} parent=0 // pred_fallthru
    _
  // Predicated region
  $region10: #{unet_down_forward.7} parent=0 // pred_check
    _
  $region11: #{unet_down_forward.7} parent=0 // pred_check_branch
    %13 = sbr.rel (0) target = $region13
  $region12: #{unet_down_forward.7} parent=0 // pred_region
    _
  $region13: #{unet_down_forward.7} parent=0 // pred_fallthru
    _
  %v14 = vld [vmem:[%s0] sm:$0xff]
  %v15 = vld [vmem:[%s1] sm:$0x1]
  %v17 = vlaneseq
  %v18 = vshrl.u32 %v17, 7
  %v19 = vsub.s32 0, %v18
  %v20 = vrot.slane %v15, %v19
  %v22 = vmul.f32 %v14, %v20
  %v23 = vld [vmem:[%s2] sm:$0x1]
  %v25 = vlaneseq
  %v26 = vshrl.u32 %v25, 7
  %v27 = vsub.s32 0, %v26
  %v28 = vrot.slane %v23, %v27
  %v30 = vadd.f32 %v22, %v28
  %vm31 = vcmp.ge.f32.partialorder %v30, 0.0
  %v32 = vmul.f32 %v30, 0.2
  %v33 = vsel %vm31, %v30, %v32
  %34 = vst [vmem:[%s3] sm:$0xff] %v33
  // Predicated region
  $region14: #{unet_down_forward.7} parent=0 // pred_check
    _
  $region15: #{unet_down_forward.7} parent=0 // pred_check_branch
    %36 = sbr.rel (0) target = $region17
  $region16: #{unet_down_forward.7} parent=0 // pred_region
    _
  $region17: #{unet_down_forward.7} parent=0 // pred_fallthru
    _
  // Predicated region
  $region18: #{unet_down_forward.7} parent=0 // pred_check
    _
  $region19: #{unet_down_forward.7} parent=0 // pred_check_branch
    %38 = sbr.rel (0) target = $region21
  $region20: #{unet_down_forward.7} parent=0 // pred_region
    _
  $region21: #{unet_down_forward.7} parent=0 // pred_fallthru
    _

// kernel: unet_down_forward.6
$region0: #{unet_down_forward.6}
  #allocation0 [shape = 'u32[]', space=smem, size = 0x4, offset = 0x4, fixed_abs, tag = 'smem constant byte address 0x4 - core index']
  #allocation1 [shape = 'u32[144,128]{1,0:T(1,128)}', space=vmem, size = 0x12000, scoped, tag = 'internal scratch']
  %s0 = inlined_call_operand.vmem [shape: bf16[128,64], index: 0, kind: input, shape index: {}]
  %s1 = inlined_call_operand.vmem [shape: bf16[64,8], index: 1, kind: input, shape index: {}]
  %s2 = inlined_call_operand.vmem [shape: f32[1,8], index: 2, kind: input, shape index: {}]
  %s3 = inlined_call_operand.vmem [shape: f32[128,8], index: 3, kind: output, shape index: {0}]
  %s4 = inlined_call_operand.vmem [shape: f32[1,8], index: 4, kind: output, shape index: {1}]
  %s5 = inlined_call_operand.vmem [shape: f32[1,8], index: 5, kind: output, shape index: {2}]
  %6 = xla_tuple %s3, %s4, %s5
  %s7 = sld [smem:[#allocation0]]
  $region38: #{unet_down_forward.6} parent=0
    _
  %s9 = ssub.s32 1, %s7
  %s10 = scalar_select 0, %s9, %s7
  // Predicated region
  $region2: #{unet_down_forward.6} parent=0 // pred_check
    _
  $region3: #{unet_down_forward.6} parent=0 // pred_check_branch
    %12 = sbr.rel (0) target = $region5
  $region4: #{unet_down_forward.6} parent=0 // pred_region
    _
  $region5: #{unet_down_forward.6} parent=0 // pred_fallthru
    _
  // Predicated region
  $region6: #{unet_down_forward.6} parent=0 // pred_check
    _
  $region7: #{unet_down_forward.6} parent=0 // pred_check_branch
    %14 = sbr.rel (0) target = $region9
  $region8: #{unet_down_forward.6} parent=0 // pred_region
    _
  $region9: #{unet_down_forward.6} parent=0 // pred_fallthru
    _
  // Predicated region
  $region10: #{unet_down_forward.6} parent=0 // pred_check
    _
  $region11: #{unet_down_forward.6} parent=0 // pred_check_branch
    %16 = sbr.rel (0) target = $region13
  $region12: #{unet_down_forward.6} parent=0 // pred_region
    _
  $region13: #{unet_down_forward.6} parent=0 // pred_fallthru
    _
  %v18 = vld [vmem:[%s0] sm:$0xf]
  %v19 = vld [vmem:[%s0 + $0x4] sm:$0xf]
  %v20 = vld [vmem:[%s0 + $0x8] sm:$0xf]
  %v21 = vld [vmem:[%s0 + $0xc] sm:$0xf]
  %v22 = vld [vmem:[%s0 + $0x10] sm:$0xf]
  %v23 = vld [vmem:[%s0 + $0x14] sm:$0xf]
  %v24 = vld [vmem:[%s0 + $0x18] sm:$0xf]
  %v25 = vld [vmem:[%s0 + $0x1c] sm:$0xf]
  %v26 = vld [vmem:[%s0 + $0x20] sm:$0xf]
  %v27 = vld [vmem:[%s0 + $0x24] sm:$0xf]
  %v28 = vld [vmem:[%s0 + $0x28] sm:$0xf]
  %v29 = vld [vmem:[%s0 + $0x2c] sm:$0xf]
  %v30 = vld [vmem:[%s0 + $0x30] sm:$0xf]
  %v31 = vld [vmem:[%s0 + $0x34] sm:$0xf]
  %v32 = vld [vmem:[%s0 + $0x38] sm:$0xf]
  %v33 = vld [vmem:[%s0 + $0x3c] sm:$0xf]
  %v34 = vld [vmem:[%s1] sm:$0xf]
  %v35 = vld [vmem:[%s1 + $0x4] sm:$0xf]
  %v36 = vld [vmem:[%s1 + $0x8] sm:$0xf]
  %v37 = vld [vmem:[%s1 + $0xc] sm:$0xf]
  %v38 = vld [vmem:[%s1 + $0x10] sm:$0xf]
  %v39 = vld [vmem:[%s1 + $0x14] sm:$0xf]
  %v40 = vld [vmem:[%s1 + $0x18] sm:$0xf]
  %v41 = vld [vmem:[%s1 + $0x1c] sm:$0xf]
  %v42 = vld [vmem:[%s2] sm:$0x1]
  %v44 = vlaneseq
  %v45 = vshrl.u32 %v44, 7
  %v46 = vsub.s32 0, %v45
  %v47 = vrot.slane %v42, %v46
  %v65 = vunpack.c.l.b16 %v18
  %v66 = vunpack.c.l.b16 %v19
  %v67 = vunpack.c.l.b16 %v20
  %v68 = vunpack.c.l.b16 %v21
  %v69 = vunpack.c.l.b16 %v22
  %v70 = vunpack.c.l.b16 %v23
  %v71 = vunpack.c.l.b16 %v24
  %v72 = vunpack.c.l.b16 %v25
  %v73 = vunpack.c.l.b16 %v26
  %v74 = vunpack.c.l.b16 %v27
  %v75 = vunpack.c.l.b16 %v28
  %v76 = vunpack.c.l.b16 %v29
  %v77 = vunpack.c.l.b16 %v30
  %v78 = vunpack.c.l.b16 %v31
  %v79 = vunpack.c.l.b16 %v32
  %v80 = vunpack.c.l.b16 %v33
  %v81 = vpack.c.b16 %v66, %v65
  %v82 = vpack.c.b16 %v68, %v67
  %v83 = vpack.c.b16 %v70, %v69
  %v84 = vpack.c.b16 %v72, %v71
  %v85 = vpack.c.b16 %v74, %v73
  %v86 = vpack.c.b16 %v76, %v75
  %v87 = vpack.c.b16 %v78, %v77
  %v88 = vpack.c.b16 %v80, %v79
  %v97 = vunpack.c.l.b16 %v34
  %v98 = vunpack.c.l.b16 %v35
  %v99 = vunpack.c.l.b16 %v36
  %v100 = vunpack.c.l.b16 %v37
  %v101 = vunpack.c.l.b16 %v38
  %v102 = vunpack.c.l.b16 %v39
  %v103 = vunpack.c.l.b16 %v40
  %v104 = vunpack.c.l.b16 %v41
  %v105 = vpack.c.b16 %v98, %v97
  %v106 = vpack.c.b16 %v100, %v99
  %v107 = vpack.c.b16 %v102, %v101
  %v108 = vpack.c.b16 %v104, %v103
  %vm113 = vcmask 523264
  %v115 = vsel %vm113, %v81, 0
  %v118 = vsel %vm113, %v82, 0
  %v121 = vsel %vm113, %v83, 0
  %v124 = vsel %vm113, %v84, 0
  %v127 = vsel %vm113, %v85, 0
  %v130 = vsel %vm113, %v86, 0
  %v133 = vsel %vm113, %v87, 0
  %v136 = vsel %vm113, %v88, 0
  %138 = vmatprep.subr.bf16.mxu0 0
  %139 = vmatpush1.bf16.msra.mxu0 %v105
  %140 = vmatprep.subr.bf16.mxu0 0
  %141 = vmatpush1.bf16.msra.mxu0 %v106
  %142 = vmatprep.subr.bf16.mxu0 0
  %143 = vmatpush1.bf16.msra.mxu0 %v107
  %144 = vmatprep.subr.bf16.mxu0 0
  %145 = vmatpush1.bf16.msra.mxu0 %v108
  %146 = vmatprep.subr.bf16.mxu0 0
  %147 = vmatpush1.bf16.msra.mxu0 0
  %148 = vmatprep.subr.bf16.mxu0 0
  %149 = vmatpush1.bf16.msra.mxu0 0
  %150 = vmatprep.subr.bf16.mxu0 0
  %151 = vmatpush1.bf16.msra.mxu0 0
  %152 = vmatprep.subr.bf16.mxu0 0
  %153 = vmatpush1.bf16.msra.mxu0 0
  %154 = vmatprep.subr.bf16.mxu0 0
  %155 = vmatpush1.bf16.msra.mxu0 0
  %156 = vmatprep.subr.bf16.mxu0 0
  %157 = vmatpush1.bf16.msra.mxu0 0
  %158 = vmatprep.subr.bf16.mxu0 0
  %159 = vmatpush1.bf16.msra.mxu0 0
  %160 = vmatprep.subr.bf16.mxu0 0
  %161 = vmatpush1.bf16.msra.mxu0 0
  %162 = vmatprep.subr.bf16.mxu0 0
  %163 = vmatpush1.bf16.msra.mxu0 0
  %164 = vmatprep.subr.bf16.mxu0 0
  %165 = vmatpush1.bf16.msra.mxu0 0
  %166 = vmatprep.subr.bf16.mxu0 0
  %167 = vmatpush1.bf16.msra.mxu0 0
  %168 = vmatprep.subr.bf16.mxu0 0
  %169 = vmatpush1.bf16.msra.mxu0 0
  %170 = vmatprep.mubr.bf16.mxu0 0
  %171 = vmatmul.mubr.bf16.gmra.mrb[0].mxu0 %v115
  %v172 = vpop.f32.mrb[0].mxu0
  %v173 = vadd.f32 %v47, %v172
  %v174 = vpop.f32.mrb[0].mxu0
  %v175 = vpop.f32.mrb[0].mxu0
  %v176 = vadd.f32 %v47, %v175
  %v177 = vpop.f32.mrb[0].mxu0
  %178 = vmatprep.mubr.bf16.mxu0 0
  %179 = vmatmul.mubr.bf16.gmra.mrb[0].mxu0 %v118
  %v180 = vpop.f32.mrb[0].mxu0
  %v181 = vadd.f32 %v47, %v180
  %v182 = vpop.f32.mrb[0].mxu0
  %v183 = vpop.f32.mrb[0].mxu0
  %v184 = vadd.f32 %v47, %v183
  %v185 = vpop.f32.mrb[0].mxu0
  %186 = vmatprep.mubr.bf16.mxu0 0
  %187 = vmatmul.mubr.bf16.gmra.mrb[0].mxu0 %v121
  %v188 = vpop.f32.mrb[0].mxu0
  %v189 = vadd.f32 %v47, %v188
  %v190 = vpop.f32.mrb[0].mxu0
  %v191 = vpop.f32.mrb[0].mxu0
  %v192 = vadd.f32 %v47, %v191
  %v193 = vpop.f32.mrb[0].mxu0
  %194 = vmatprep.mubr.bf16.mxu0 0
  %195 = vmatmul.mubr.bf16.gmra.mrb[0].mxu0 %v124
  %v196 = vpop.f32.mrb[0].mxu0
  %v197 = vadd.f32 %v47, %v196
  %v198 = vpop.f32.mrb[0].mxu0
  %v199 = vpop.f32.mrb[0].mxu0
  %v200 = vadd.f32 %v47, %v199
  %v201 = vpop.f32.mrb[0].mxu0
  %202 = vmatprep.mubr.bf16.mxu0 0
  %203 = vmatmul.mubr.bf16.gmra.mrb[0].mxu0 %v127
  %v204 = vpop.f32.mrb[0].mxu0
  %v205 = vadd.f32 %v47, %v204
  %v206 = vpop.f32.mrb[0].mxu0
  %v207 = vpop.f32.mrb[0].mxu0
  %v208 = vadd.f32 %v47, %v207
  %v209 = vpop.f32.mrb[0].mxu0
  %210 = vmatprep.mubr.bf16.mxu0 0
  %211 = vmatmul.mubr.bf16.gmra.mrb[0].mxu0 %v130
  %v212 = vpop.f32.mrb[0].mxu0
  %v213 = vadd.f32 %v47, %v212
  %v214 = vpop.f32.mrb[0].mxu0
  %v215 = vpop.f32.mrb[0].mxu0
  %v216 = vadd.f32 %v47, %v215
  %v217 = vpop.f32.mrb[0].mxu0
  %218 = vmatprep.mubr.bf16.mxu0 0
  %219 = vmatmul.mubr.bf16.gmra.mrb[0].mxu0 %v133
  %v220 = vpop.f32.mrb[0].mxu0
  %v221 = vadd.f32 %v47, %v220
  %v222 = vpop.f32.mrb[0].mxu0
  %v223 = vpop.f32.mrb[0].mxu0
  %v224 = vadd.f32 %v47, %v223
  %v225 = vpop.f32.mrb[0].mxu0
  %226 = vmatprep.mubr.bf16.mxu0 0
  %227 = vmatmul.mubr.bf16.gmra.mrb[0].mxu0 %v136
  %v228 = vpop.f32.mrb[0].mxu0
  %v229 = vadd.f32 %v47, %v228
  %v230 = vpop.f32.mrb[0].mxu0
  %v231 = vpop.f32.mrb[0].mxu0
  %v232 = vadd.f32 %v47, %v231
  %v233 = vpop.f32.mrb[0].mxu0
  %234 = vdwg.mxu0
  %vm235 = vcmask 64512
  %236 = vst.msk [vmem:[%s3] sm:$0xff] %vm235, %v173
  %237 = vst.msk [vmem:[%s3 + $0x8] sm:$0xff] %vm235, %v176
  %238 = vst.msk [vmem:[%s3 + $0x10] sm:$0xff] %vm235, %v181
  %239 = vst.msk [vmem:[%s3 + $0x18] sm:$0xff] %vm235, %v184
  %240 = vst.msk [vmem:[%s3 + $0x20] sm:$0xff] %vm235, %v189
  %241 = vst.msk [vmem:[%s3 + $0x28] sm:$0xff] %vm235, %v192
  %242 = vst.msk [vmem:[%s3 + $0x30] sm:$0xff] %vm235, %v197
  %243 = vst.msk [vmem:[%s3 + $0x38] sm:$0xff] %vm235, %v200
  %244 = vst.msk [vmem:[%s3 + $0x40] sm:$0xff] %vm235, %v205
  %245 = vst.msk [vmem:[%s3 + $0x48] sm:$0xff] %vm235, %v208
  %246 = vst.msk [vmem:[%s3 + $0x50] sm:$0xff] %vm235, %v213
  %247 = vst.msk [vmem:[%s3 + $0x58] sm:$0xff] %vm235, %v216
  %248 = vst.msk [vmem:[%s3 + $0x60] sm:$0xff] %vm235, %v221
  %249 = vst.msk [vmem:[%s3 + $0x68] sm:$0xff] %vm235, %v224
  %250 = vst.msk [vmem:[%s3 + $0x70] sm:$0xff] %vm235, %v229
  %251 = vst.msk [vmem:[%s3 + $0x78] sm:$0xff] %vm235, %v232
  %v252 = vsel %vm235, %v173, 0.0
  %v253 = vsel %vm235, %v176, 0.0
  %v254 = vadd.f32 %v252, %v253
  %v255 = vsel %vm235, %v181, 0.0
  %v256 = vadd.f32 %v254, %v255
  %v257 = vsel %vm235, %v184, 0.0
  %v258 = vadd.f32 %v256, %v257
  %v259 = vsel %vm235, %v189, 0.0
  %v260 = vadd.f32 %v258, %v259
  %v261 = vsel %vm235, %v192, 0.0
  %v262 = vadd.f32 %v260, %v261
  %v263 = vsel %vm235, %v197, 0.0
  %v264 = vadd.f32 %v262, %v263
  %v265 = vsel %vm235, %v200, 0.0
  %v266 = vadd.f32 %v264, %v265
  %v267 = vsel %vm235, %v205, 0.0
  %v268 = vadd.f32 %v266, %v267
  %v269 = vsel %vm235, %v208, 0.0
  %v270 = vadd.f32 %v268, %v269
  %v271 = vsel %vm235, %v213, 0.0
  %v272 = vadd.f32 %v270, %v271
  %v273 = vsel %vm235, %v216, 0.0
  %v274 = vadd.f32 %v272, %v273
  %v275 = vsel %vm235, %v221, 0.0
  %v276 = vadd.f32 %v274, %v275
  %v277 = vsel %vm235, %v224, 0.0
  %v278 = vadd.f32 %v276, %v277
  %v279 = vsel %vm235, %v229, 0.0
  %v280 = vadd.f32 %v278, %v279
  %v281 = vsel %vm235, %v232, 0.0
  %v282 = vadd.f32 %v280, %v281
  %v283 = vrot.slane %v282, 4
  %v284 = vadd.f32 %v282, %v283
  %v285 = vrot.slane %v284, 2
  %v286 = vadd.f32 %v284, %v285
  %v287 = vrot.slane %v286, 1
  %v288 = vadd.f32 %v286, %v287
  %vm289 = vcmask 57344
  %290 = vst.msk [vmem:[%s4] sm:$0x1] %vm289, %v288
  %v291 = vmul.f32 %v173, %v173
  %v292 = vmul.f32 %v176, %v176
  %v293 = vmul.f32 %v181, %v181
  %v294 = vmul.f32 %v184, %v184
  %v295 = vmul.f32 %v189, %v189
  %v296 = vmul.f32 %v192, %v192
  %v297 = vmul.f32 %v197, %v197
  %v298 = vmul.f32 %v200, %v200
  %v299 = vmul.f32 %v205, %v205
  %v300 = vmul.f32 %v208, %v208
  %v301 = vmul.f32 %v213, %v213
  %v302 = vmul.f32 %v216, %v216
  %v303 = vmul.f32 %v221, %v221
  %v304 = vmul.f32 %v224, %v224
  %v305 = vmul.f32 %v229, %v229
  %v306 = vmul.f32 %v232, %v232
  %v307 = vsel %vm235, %v291, 0.0
  %v308 = vsel %vm235, %v292, 0.0
  %v309 = vadd.f32 %v307, %v308
  %v310 = vsel %vm235, %v293, 0.0
  %v311 = vadd.f32 %v309, %v310
  %v312 = vsel %vm235, %v294, 0.0
  %v313 = vadd.f32 %v311, %v312
  %v314 = vsel %vm235, %v295, 0.0
  %v315 = vadd.f32 %v313, %v314
  %v316 = vsel %vm235, %v296, 0.0
  %v317 = vadd.f32 %v315, %v316
  %v318 = vsel %vm235, %v297, 0.0
  %v319 = vadd.f32 %v317, %v318
  %v320 = vsel %vm235, %v298, 0.0
  %v321 = vadd.f32 %v319, %v320
  %v322 = vsel %vm235, %v299, 0.0
  %v323 = vadd.f32 %v321, %v322
  %v324 = vsel %vm235, %v300, 0.0
  %v325 = vadd.f32 %v323, %v324
  %v326 = vsel %vm235, %v301, 0.0
  %v327 = vadd.f32 %v325, %v326
  %v328 = vsel %vm235, %v302, 0.0
  %v329 = vadd.f32 %v327, %v328
  %v330 = vsel %vm235, %v303, 0.0
  %v331 = vadd.f32 %v329, %v330
  %v332 = vsel %vm235, %v304, 0.0
  %v333 = vadd.f32 %v331, %v332
  %v334 = vsel %vm235, %v305, 0.0
  %v335 = vadd.f32 %v333, %v334
  %v336 = vsel %vm235, %v306, 0.0
  %v337 = vadd.f32 %v335, %v336
  %v338 = vrot.slane %v337, 4
  %v339 = vadd.f32 %v337, %v338
  %v340 = vrot.slane %v339, 2
  %v341 = vadd.f32 %v339, %v340
  %v342 = vrot.slane %v341, 1
  %v343 = vadd.f32 %v341, %v342
  %344 = vst.msk [vmem:[%s5] sm:$0x1] %vm289, %v343
  // Predicated region
  $region14: #{unet_down_forward.6} parent=0 // pred_check
    _
  $region15: #{unet_down_forward.6} parent=0 // pred_check_branch
    %346 = sbr.rel (0) target = $region17
  $region16: #{unet_down_forward.6} parent=0 // pred_region
    _
  $region17: #{unet_down_forward.6} parent=0 // pred_fallthru
    _
  // Predicated region
  $region18: #{unet_down_forward.6} parent=0 // pred_check
    _
  $region19: #{unet_down_forward.6} parent=0 // pred_check_branch
    %348 = sbr.rel (0) target = $region21
  $region20: #{unet_down_forward.6} parent=0 // pred_region
    _
  $region21: #{unet_down_forward.6} parent=0 // pred_fallthru
    _
  // Predicated region
  $region22: #{unet_down_forward.6} parent=0 // pred_check
    _
  $region23: #{unet_down_forward.6} parent=0 // pred_check_branch
    %350 = sbr.rel (0) target = $region25
  $region24: #{unet_down_forward.6} parent=0 // pred_region
    _
  $region25: #{unet_down_forward.6} parent=0 // pred_fallthru
    _
  // Predicated region
  $region26: #{unet_down_forward.6} parent=0 // pred_check
    _
  $region27: #{unet_down_forward.6} parent=0 // pred_check_branch
    %352 = sbr.rel (0) target = $region29
  $region28: #{unet_down_forward.6} parent=0 // pred_region
    _
  $region29: #{unet_down_forward.6} parent=0 // pred_fallthru
    _
  // Predicated region
  $region30: #{unet_down_forward.6} parent=0 // pred_check
    _
  $region31: #{unet_down_forward.6} parent=0 // pred_check_branch
    %354 = sbr.rel (0) target = $region33
  $region32: #{unet_down_forward.6} parent=0 // pred_region
    _
  $region33: #{unet_down_forward.6} parent=0 // pred_fallthru
    _
  // Predicated region
  $region34: #{unet_down_forward.6} parent=0 // pred_check
    _
  $region35: #{unet_down_forward.6} parent=0 // pred_check_branch
    %356 = sbr.rel (0) target = $region37
  $region36: #{unet_down_forward.6} parent=0 // pred_region
    _
  $region37: #{unet_down_forward.6} parent=0 // pred_fallthru
    _

// kernel: unet_down_forward.9
$region0: #{unet_down_forward.9}
  #allocation0 [shape = 'u32[]', space=smem, size = 0x4, offset = 0x4, fixed_abs, tag = 'smem constant byte address 0x4 - core index']
  #allocation1 [shape = 'u32[144,128]{1,0:T(1,128)}', space=vmem, size = 0x12000, scoped, tag = 'internal scratch']
  %s0 = inlined_call_operand.vmem [shape: f32[8,128], index: 0, kind: input, shape index: {}]
  %s1 = inlined_call_operand.vmem [shape: f32[1,128], index: 1, kind: input, shape index: {}]
  %s2 = inlined_call_operand.vmem [shape: f32[1,128], index: 2, kind: input, shape index: {}]
  %s3 = inlined_call_operand.vmem [shape: f32[8,128], index: 3, kind: output, shape index: {}]
  %s4 = sld [smem:[#allocation0]]
  $region22: #{unet_down_forward.9} parent=0
    _
  %s6 = ssub.s32 1, %s4
  %s7 = scalar_select 0, %s6, %s4
  // Predicated region
  $region2: #{unet_down_forward.9} parent=0 // pred_check
    _
  $region3: #{unet_down_forward.9} parent=0 // pred_check_branch
    %9 = sbr.rel (0) target = $region5
  $region4: #{unet_down_forward.9} parent=0 // pred_region
    _
  $region5: #{unet_down_forward.9} parent=0 // pred_fallthru
    _
  // Predicated region
  $region6: #{unet_down_forward.9} parent=0 // pred_check
    _
  $region7: #{unet_down_forward.9} parent=0 // pred_check_branch
    %11 = sbr.rel (0) target = $region9
  $region8: #{unet_down_forward.9} parent=0 // pred_region
    _
  $region9: #{unet_down_forward.9} parent=0 // pred_fallthru
    _
  // Predicated region
  $region10: #{unet_down_forward.9} parent=0 // pred_check
    _
  $region11: #{unet_down_forward.9} parent=0 // pred_check_branch
    %13 = sbr.rel (0) target = $region13
  $region12: #{unet_down_forward.9} parent=0 // pred_region
    _
  $region13: #{unet_down_forward.9} parent=0 // pred_fallthru
    _
  %v14 = vld [vmem:[%s0] sm:$0xff]
  %v15 = vld [vmem:[%s1] sm:$0x1]
  %v17 = vlaneseq
  %v18 = vshrl.u32 %v17, 7
  %v19 = vsub.s32 0, %v18
  %v20 = vrot.slane %v15, %v19
  %v22 = vmul.f32 %v14, %v20
  %v23 = vld [vmem:[%s2] sm:$0x1]
  %v25 = vlaneseq
  %v26 = vshrl.u32 %v25, 7
  %v27 = vsub.s32 0, %v26
  %v28 = vrot.slane %v23, %v27
  %v30 = vadd.f32 %v22, %v28
  %vm31 = vcmp.ge.f32.partialorder %v30, 0.0
  %v32 = vmul.f32 %v30, 0.0
  %v33 = vsel %vm31, %v30, %v32
  %34 = vst [vmem:[%s3] sm:$0xff] %v33
  // Predicated region
  $region14: #{unet_down_forward.9} parent=0 // pred_check
    _
  $region15: #{unet_down_forward.9} parent=0 // pred_check_branch
    %36 = sbr.rel (0) target = $region17
  $region16: #{unet_down_forward.9} parent=0 // pred_region
    _
  $region17: #{unet_down_forward.9} parent=0 // pred_fallthru
    _
  // Predicated region
  $region18: #{unet_down_forward.9} parent=0 // pred_check
    _
  $region19: #{unet_down_forward.9} parent=0 // pred_check_branch
    %38 = sbr.rel (0) target = $region21
  $region20: #{unet_down_forward.9} parent=0 // pred_region
    _
  $region21: #{unet_down_forward.9} parent=0 // pred_fallthru
    _

// kernel: unet_down_forward.11
$region0: #{unet_down_forward.11}
  #allocation0 [shape = 'u32[]', space=smem, size = 0x4, offset = 0x4, fixed_abs, tag = 'smem constant byte address 0x4 - core index']
  #allocation1 [shape = 'u32[144,128]{1,0:T(1,128)}', space=vmem, size = 0x12000, scoped, tag = 'internal scratch']
  %s0 = inlined_call_operand.vmem [shape: f32[8,128], index: 0, kind: input, shape index: {}]
  %s1 = inlined_call_operand.vmem [shape: f32[8,128], index: 1, kind: input, shape index: {}]
  %s2 = inlined_call_operand.vmem [shape: f32[1,128], index: 2, kind: input, shape index: {}]
  %s3 = inlined_call_operand.vmem [shape: f32[1,128], index: 3, kind: input, shape index: {}]
  %s4 = inlined_call_operand.vmem [shape: f32[8,128], index: 4, kind: output, shape index: {}]
  %s5 = sld [smem:[#allocation0]]
  $region26: #{unet_down_forward.11} parent=0
    _
  %s7 = ssub.s32 1, %s5
  %s8 = scalar_select 0, %s7, %s5
  // Predicated region
  $region2: #{unet_down_forward.11} parent=0 // pred_check
    _
  $region3: #{unet_down_forward.11} parent=0 // pred_check_branch
    %10 = sbr.rel (0) target = $region5
  $region4: #{unet_down_forward.11} parent=0 // pred_region
    _
  $region5: #{unet_down_forward.11} parent=0 // pred_fallthru
    _
  // Predicated region
  $region6: #{unet_down_forward.11} parent=0 // pred_check
    _
  $region7: #{unet_down_forward.11} parent=0 // pred_check_branch
    %12 = sbr.rel (0) target = $region9
  $region8: #{unet_down_forward.11} parent=0 // pred_region
    _
  $region9: #{unet_down_forward.11} parent=0 // pred_fallthru
    _
  // Predicated region
  $region10: #{unet_down_forward.11} parent=0 // pred_check
    _
  $region11: #{unet_down_forward.11} parent=0 // pred_check_branch
    %14 = sbr.rel (0) target = $region13
  $region12: #{unet_down_forward.11} parent=0 // pred_region
    _
  $region13: #{unet_down_forward.11} parent=0 // pred_fallthru
    _
  // Predicated region
  $region14: #{unet_down_forward.11} parent=0 // pred_check
    _
  $region15: #{unet_down_forward.11} parent=0 // pred_check_branch
    %16 = sbr.rel (0) target = $region17
  $region16: #{unet_down_forward.11} parent=0 // pred_region
    _
  $region17: #{unet_down_forward.11} parent=0 // pred_fallthru
    _
  %v17 = vld [vmem:[%s0] sm:$0xff]
  %v18 = vld [vmem:[%s2] sm:$0x1]
  %v20 = vlaneseq
  %v21 = vshrl.u32 %v20, 7
  %v22 = vsub.s32 0, %v21
  %v23 = vrot.slane %v18, %v22
  %v25 = vmul.f32 %v17, %v23
  %v26 = vld [vmem:[%s3] sm:$0x1]
  %v28 = vlaneseq
  %v29 = vshrl.u32 %v28, 7
  %v30 = vsub.s32 0, %v29
  %v31 = vrot.slane %v26, %v30
  %v33 = vadd.f32 %v25, %v31
  %v34 = vld [vmem:[%s1] sm:$0xff]
  %v35 = vadd.f32 %v33, %v34
  %36 = vst [vmem:[%s4] sm:$0xff] %v35
  // Predicated region
  $region18: #{unet_down_forward.11} parent=0 // pred_check
    _
  $region19: #{unet_down_forward.11} parent=0 // pred_check_branch
    %38 = sbr.rel (0) target = $region21
  $region20: #{unet_down_forward.11} parent=0 // pred_region
    _
  $region21: #{unet_down_forward.11} parent=0 // pred_fallthru
    _
  // Predicated region
  $region22: #{unet_down_forward.11} parent=0 // pred_check
    _
  $region23: #{unet_down_forward.11} parent=0 // pred_check_branch
    %40 = sbr.rel (0) target = $region25
  $region24: #{unet_down_forward.11} parent=0 // pred_region
    _
  $region25: #{unet_down_forward.11} parent=0 // pred_fallthru
    _

// kernel: unet_down_forward.8
$region0: #{unet_down_forward.8}
  #allocation0 [shape = 'u32[]', space=smem, size = 0x4, offset = 0x4, fixed_abs, tag = 'smem constant byte address 0x4 - core index']
  #allocation1 [shape = 'u32[144,128]{1,0:T(1,128)}', space=vmem, size = 0x12000, scoped, tag = 'internal scratch']
  %s0 = inlined_call_operand.vmem [shape: bf16[128,72], index: 0, kind: input, shape index: {}]
  %s1 = inlined_call_operand.vmem [shape: bf16[72,8], index: 1, kind: input, shape index: {}]
  %s2 = inlined_call_operand.vmem [shape: f32[1,8], index: 2, kind: input, shape index: {}]
  %s3 = inlined_call_operand.vmem [shape: f32[128,8], index: 3, kind: output, shape index: {0}]
  %s4 = inlined_call_operand.vmem [shape: f32[1,8], index: 4, kind: output, shape index: {1}]
  %s5 = inlined_call_operand.vmem [shape: f32[1,8], index: 5, kind: output, shape index: {2}]
  %6 = xla_tuple %s3, %s4, %s5
  %s7 = sld [smem:[#allocation0]]
  $region38: #{unet_down_forward.8} parent=0
    _
  %s9 = ssub.s32 1, %s7
  %s10 = scalar_select 0, %s9, %s7
  // Predicated region
  $region2: #{unet_down_forward.8} parent=0 // pred_check
    _
  $region3: #{unet_down_forward.8} parent=0 // pred_check_branch
    %12 = sbr.rel (0) target = $region5
  $region4: #{unet_down_forward.8} parent=0 // pred_region
    _
  $region5: #{unet_down_forward.8} parent=0 // pred_fallthru
    _
  // Predicated region
  $region6: #{unet_down_forward.8} parent=0 // pred_check
    _
  $region7: #{unet_down_forward.8} parent=0 // pred_check_branch
    %14 = sbr.rel (0) target = $region9
  $region8: #{unet_down_forward.8} parent=0 // pred_region
    _
  $region9: #{unet_down_forward.8} parent=0 // pred_fallthru
    _
  // Predicated region
  $region10: #{unet_down_forward.8} parent=0 // pred_check
    _
  $region11: #{unet_down_forward.8} parent=0 // pred_check_branch
    %16 = sbr.rel (0) target = $region13
  $region12: #{unet_down_forward.8} parent=0 // pred_region
    _
  $region13: #{unet_down_forward.8} parent=0 // pred_fallthru
    _
  %v18 = vld [vmem:[%s0] sm:$0xf]
  %v19 = vld [vmem:[%s0 + $0x4] sm:$0xf]
  %v20 = vld [vmem:[%s0 + $0x8] sm:$0xf]
  %v21 = vld [vmem:[%s0 + $0xc] sm:$0xf]
  %v22 = vld [vmem:[%s0 + $0x10] sm:$0xf]
  %v23 = vld [vmem:[%s0 + $0x14] sm:$0xf]
  %v24 = vld [vmem:[%s0 + $0x18] sm:$0xf]
  %v25 = vld [vmem:[%s0 + $0x1c] sm:$0xf]
  %v26 = vld [vmem:[%s0 + $0x20] sm:$0xf]
  %v27 = vld [vmem:[%s0 + $0x24] sm:$0xf]
  %v28 = vld [vmem:[%s0 + $0x28] sm:$0xf]
  %v29 = vld [vmem:[%s0 + $0x2c] sm:$0xf]
  %v30 = vld [vmem:[%s0 + $0x30] sm:$0xf]
  %v31 = vld [vmem:[%s0 + $0x34] sm:$0xf]
  %v32 = vld [vmem:[%s0 + $0x38] sm:$0xf]
  %v33 = vld [vmem:[%s0 + $0x3c] sm:$0xf]
  %v34 = vld [vmem:[%s1] sm:$0xf]
  %v35 = vld [vmem:[%s1 + $0x4] sm:$0xf]
  %v36 = vld [vmem:[%s1 + $0x8] sm:$0xf]
  %v37 = vld [vmem:[%s1 + $0xc] sm:$0xf]
  %v38 = vld [vmem:[%s1 + $0x10] sm:$0xf]
  %v39 = vld [vmem:[%s1 + $0x14] sm:$0xf]
  %v40 = vld [vmem:[%s1 + $0x18] sm:$0xf]
  %v41 = vld [vmem:[%s1 + $0x1c] sm:$0xf]
  %v42 = vld [vmem:[%s1 + $0x20] sm:$0xf]
  %v43 = vld [vmem:[%s2] sm:$0x1]
  %v45 = vlaneseq
  %v46 = vshrl.u32 %v45, 7
  %v47 = vsub.s32 0, %v46
  %v48 = vrot.slane %v43, %v47
  %v66 = vunpack.c.l.b16 %v18
  %v67 = vunpack.c.l.b16 %v19
  %v68 = vunpack.c.l.b16 %v20
  %v69 = vunpack.c.l.b16 %v21
  %v70 = vunpack.c.l.b16 %v22
  %v71 = vunpack.c.l.b16 %v23
  %v72 = vunpack.c.l.b16 %v24
  %v73 = vunpack.c.l.b16 %v25
  %v74 = vunpack.c.l.b16 %v26
  %v75 = vunpack.c.l.b16 %v27
  %v76 = vunpack.c.l.b16 %v28
  %v77 = vunpack.c.l.b16 %v29
  %v78 = vunpack.c.l.b16 %v30
  %v79 = vunpack.c.l.b16 %v31
  %v80 = vunpack.c.l.b16 %v32
  %v81 = vunpack.c.l.b16 %v33
  %v82 = vpack.c.b16 %v67, %v66
  %v83 = vpack.c.b16 %v69, %v68
  %v84 = vpack.c.b16 %v71, %v70
  %v85 = vpack.c.b16 %v73, %v72
  %v86 = vpack.c.b16 %v75, %v74
  %v87 = vpack.c.b16 %v77, %v76
  %v88 = vpack.c.b16 %v79, %v78
  %v89 = vpack.c.b16 %v81, %v80
  %v99 = vunpack.c.l.b16 %v34
  %v100 = vunpack.c.l.b16 %v35
  %v101 = vunpack.c.l.b16 %v36
  %v102 = vunpack.c.l.b16 %v37
  %v103 = vunpack.c.l.b16 %v38
  %v104 = vunpack.c.l.b16 %v39
  %v105 = vunpack.c.l.b16 %v40
  %v106 = vunpack.c.l.b16 %v41
  %v107 = vunpack.c.l.b16 %v42
  %v108 = vpack.c.b16 %v100, %v99
  %v109 = vpack.c.b16 %v102, %v101
  %v110 = vpack.c.b16 %v104, %v103
  %v111 = vpack.c.b16 %v106, %v105
  %v112 = vpack.c.b16 %v107, %v107
  %vm117 = vcmask 588800
  %v119 = vsel %vm117, %v82, 0
  %v122 = vsel %vm117, %v83, 0
  %v125 = vsel %vm117, %v84, 0
  %v128 = vsel %vm117, %v85, 0
  %v131 = vsel %vm117, %v86, 0
  %v134 = vsel %vm117, %v87, 0
  %v137 = vsel %vm117, %v88, 0
  %v140 = vsel %vm117, %v89, 0
  %vm142 = vcmask 1043456
  %v144 = vsel %vm142, %v112, 0
  %146 = vmatprep.subr.bf16.mxu0 0
  %147 = vmatpush1.bf16.msra.mxu0 %v108
  %148 = vmatprep.subr.bf16.mxu0 0
  %149 = vmatpush1.bf16.msra.mxu0 %v109
  %150 = vmatprep.subr.bf16.mxu0 0
  %151 = vmatpush1.bf16.msra.mxu0 %v110
  %152 = vmatprep.subr.bf16.mxu0 0
  %153 = vmatpush1.bf16.msra.mxu0 %v111
  %154 = vmatprep.subr.bf16.mxu0 0
  %155 = vmatpush1.bf16.msra.mxu0 %v144
  %156 = vmatprep.subr.bf16.mxu0 0
  %157 = vmatpush1.bf16.msra.mxu0 0
  %158 = vmatprep.subr.bf16.mxu0 0
  %159 = vmatpush1.bf16.msra.mxu0 0
  %160 = vmatprep.subr.bf16.mxu0 0
  %161 = vmatpush1.bf16.msra.mxu0 0
  %162 = vmatprep.subr.bf16.mxu0 0
  %163 = vmatpush1.bf16.msra.mxu0 0
  %164 = vmatprep.subr.bf16.mxu0 0
  %165 = vmatpush1.bf16.msra.mxu0 0
  %166 = vmatprep.subr.bf16.mxu0 0
  %167 = vmatpush1.bf16.msra.mxu0 0
  %168 = vmatprep.subr.bf16.mxu0 0
  %169 = vmatpush1.bf16.msra.mxu0 0
  %170 = vmatprep.subr.bf16.mxu0 0
  %171 = vmatpush1.bf16.msra.mxu0 0
  %172 = vmatprep.subr.bf16.mxu0 0
  %173 = vmatpush1.bf16.msra.mxu0 0
  %174 = vmatprep.subr.bf16.mxu0 0
  %175 = vmatpush1.bf16.msra.mxu0 0
  %176 = vmatprep.subr.bf16.mxu0 0
  %177 = vmatpush1.bf16.msra.mxu0 0
  %178 = vmatprep.mubr.bf16.mxu0 0
  %179 = vmatmul.mubr.bf16.gmra.mrb[0].mxu0 %v119
  %v180 = vpop.f32.mrb[0].mxu0
  %v181 = vadd.f32 %v48, %v180
  %v182 = vpop.f32.mrb[0].mxu0
  %v183 = vpop.f32.mrb[0].mxu0
  %v184 = vadd.f32 %v48, %v183
  %v185 = vpop.f32.mrb[0].mxu0
  %186 = vmatprep.mubr.bf16.mxu0 0
  %187 = vmatmul.mubr.bf16.gmra.mrb[0].mxu0 %v122
  %v188 = vpop.f32.mrb[0].mxu0
  %v189 = vadd.f32 %v48, %v188
  %v190 = vpop.f32.mrb[0].mxu0
  %v191 = vpop.f32.mrb[0].mxu0
  %v192 = vadd.f32 %v48, %v191
  %v193 = vpop.f32.mrb[0].mxu0
  %194 = vmatprep.mubr.bf16.mxu0 0
  %195 = vmatmul.mubr.bf16.gmra.mrb[0].mxu0 %v125
  %v196 = vpop.f32.mrb[0].mxu0
  %v197 = vadd.f32 %v48, %v196
  %v198 = vpop.f32.mrb[0].mxu0
  %v199 = vpop.f32.mrb[0].mxu0
  %v200 = vadd.f32 %v48, %v199
  %v201 = vpop.f32.mrb[0].mxu0
  %202 = vmatprep.mubr.bf16.mxu0 0
  %203 = vmatmul.mubr.bf16.gmra.mrb[0].mxu0 %v128
  %v204 = vpop.f32.mrb[0].mxu0
  %v205 = vadd.f32 %v48, %v204
  %v206 = vpop.f32.mrb[0].mxu0
  %v207 = vpop.f32.mrb[0].mxu0
  %v208 = vadd.f32 %v48, %v207
  %v209 = vpop.f32.mrb[0].mxu0
  %210 = vmatprep.mubr.bf16.mxu0 0
  %211 = vmatmul.mubr.bf16.gmra.mrb[0].mxu0 %v131
  %v212 = vpop.f32.mrb[0].mxu0
  %v213 = vadd.f32 %v48, %v212
  %v214 = vpop.f32.mrb[0].mxu0
  %v215 = vpop.f32.mrb[0].mxu0
  %v216 = vadd.f32 %v48, %v215
  %v217 = vpop.f32.mrb[0].mxu0
  %218 = vmatprep.mubr.bf16.mxu0 0
  %219 = vmatmul.mubr.bf16.gmra.mrb[0].mxu0 %v134
  %v220 = vpop.f32.mrb[0].mxu0
  %v221 = vadd.f32 %v48, %v220
  %v222 = vpop.f32.mrb[0].mxu0
  %v223 = vpop.f32.mrb[0].mxu0
  %v224 = vadd.f32 %v48, %v223
  %v225 = vpop.f32.mrb[0].mxu0
  %226 = vmatprep.mubr.bf16.mxu0 0
  %227 = vmatmul.mubr.bf16.gmra.mrb[0].mxu0 %v137
  %v228 = vpop.f32.mrb[0].mxu0
  %v229 = vadd.f32 %v48, %v228
  %v230 = vpop.f32.mrb[0].mxu0
  %v231 = vpop.f32.mrb[0].mxu0
  %v232 = vadd.f32 %v48, %v231
  %v233 = vpop.f32.mrb[0].mxu0
  %234 = vmatprep.mubr.bf16.mxu0 0
  %235 = vmatmul.mubr.bf16.gmra.mrb[0].mxu0 %v140
  %v236 = vpop.f32.mrb[0].mxu0
  %v237 = vadd.f32 %v48, %v236
  %v238 = vpop.f32.mrb[0].mxu0
  %v239 = vpop.f32.mrb[0].mxu0
  %v240 = vadd.f32 %v48, %v239
  %v241 = vpop.f32.mrb[0].mxu0
  %242 = vdwg.mxu0
  %vm243 = vcmask 64512
  %244 = vst.msk [vmem:[%s3] sm:$0xff] %vm243, %v181
  %245 = vst.msk [vmem:[%s3 + $0x8] sm:$0xff] %vm243, %v184
  %246 = vst.msk [vmem:[%s3 + $0x10] sm:$0xff] %vm243, %v189
  %247 = vst.msk [vmem:[%s3 + $0x18] sm:$0xff] %vm243, %v192
  %248 = vst.msk [vmem:[%s3 + $0x20] sm:$0xff] %vm243, %v197
  %249 = vst.msk [vmem:[%s3 + $0x28] sm:$0xff] %vm243, %v200
  %250 = vst.msk [vmem:[%s3 + $0x30] sm:$0xff] %vm243, %v205
  %251 = vst.msk [vmem:[%s3 + $0x38] sm:$0xff] %vm243, %v208
  %252 = vst.msk [vmem:[%s3 + $0x40] sm:$0xff] %vm243, %v213
  %253 = vst.msk [vmem:[%s3 + $0x48] sm:$0xff] %vm243, %v216
  %254 = vst.msk [vmem:[%s3 + $0x50] sm:$0xff] %vm243, %v221
  %255 = vst.msk [vmem:[%s3 + $0x58] sm:$0xff] %vm243, %v224
  %256 = vst.msk [vmem:[%s3 + $0x60] sm:$0xff] %vm243, %v229
  %257 = vst.msk [vmem:[%s3 + $0x68] sm:$0xff] %vm243, %v232
  %258 = vst.msk [vmem:[%s3 + $0x70] sm:$0xff] %vm243, %v237
  %259 = vst.msk [vmem:[%s3 + $0x78] sm:$0xff] %vm243, %v240
  %v260 = vsel %vm243, %v181, 0.0
  %v261 = vsel %vm243, %v184, 0.0
  %v262 = vadd.f32 %v260, %v261
  %v263 = vsel %vm243, %v189, 0.0
  %v264 = vadd.f32 %v262, %v263
  %v265 = vsel %vm243, %v192, 0.0
  %v266 = vadd.f32 %v264, %v265
  %v267 = vsel %vm243, %v197, 0.0
  %v268 = vadd.f32 %v266, %v267
  %v269 = vsel %vm243, %v200, 0.0
  %v270 = vadd.f32 %v268, %v269
  %v271 = vsel %vm243, %v205, 0.0
  %v272 = vadd.f32 %v270, %v271
  %v273 = vsel %vm243, %v208, 0.0
  %v274 = vadd.f32 %v272, %v273
  %v275 = vsel %vm243, %v213, 0.0
  %v276 = vadd.f32 %v274, %v275
  %v277 = vsel %vm243, %v216, 0.0
  %v278 = vadd.f32 %v276, %v277
  %v279 = vsel %vm243, %v221, 0.0
  %v280 = vadd.f32 %v278, %v279
  %v281 = vsel %vm243, %v224, 0.0
  %v282 = vadd.f32 %v280, %v281
  %v283 = vsel %vm243, %v229, 0.0
  %v284 = vadd.f32 %v282, %v283
  %v285 = vsel %vm243, %v232, 0.0
  %v286 = vadd.f32 %v284, %v285
  %v287 = vsel %vm243, %v237, 0.0
  %v288 = vadd.f32 %v286, %v287
  %v289 = vsel %vm243, %v240, 0.0
  %v290 = vadd.f32 %v288, %v289
  %v291 = vrot.slane %v290, 4
  %v292 = vadd.f32 %v290, %v291
  %v293 = vrot.slane %v292, 2
  %v294 = vadd.f32 %v292, %v293
  %v295 = vrot.slane %v294, 1
  %v296 = vadd.f32 %v294, %v295
  %vm297 = vcmask 57344
  %298 = vst.msk [vmem:[%s4] sm:$0x1] %vm297, %v296
  %v299 = vmul.f32 %v181, %v181
  %v300 = vmul.f32 %v184, %v184
  %v301 = vmul.f32 %v189, %v189
  %v302 = vmul.f32 %v192, %v192
  %v303 = vmul.f32 %v197, %v197
  %v304 = vmul.f32 %v200, %v200
  %v305 = vmul.f32 %v205, %v205
  %v306 = vmul.f32 %v208, %v208
  %v307 = vmul.f32 %v213, %v213
  %v308 = vmul.f32 %v216, %v216
  %v309 = vmul.f32 %v221, %v221
  %v310 = vmul.f32 %v224, %v224
  %v311 = vmul.f32 %v229, %v229
  %v312 = vmul.f32 %v232, %v232
  %v313 = vmul.f32 %v237, %v237
  %v314 = vmul.f32 %v240, %v240
  %v315 = vsel %vm243, %v299, 0.0
  %v316 = vsel %vm243, %v300, 0.0
  %v317 = vadd.f32 %v315, %v316
  %v318 = vsel %vm243, %v301, 0.0
  %v319 = vadd.f32 %v317, %v318
  %v320 = vsel %vm243, %v302, 0.0
  %v321 = vadd.f32 %v319, %v320
  %v322 = vsel %vm243, %v303, 0.0
  %v323 = vadd.f32 %v321, %v322
  %v324 = vsel %vm243, %v304, 0.0
  %v325 = vadd.f32 %v323, %v324
  %v326 = vsel %vm243, %v305, 0.0
  %v327 = vadd.f32 %v325, %v326
  %v328 = vsel %vm243, %v306, 0.0
  %v329 = vadd.f32 %v327, %v328
  %v330 = vsel %vm243, %v307, 0.0
  %v331 = vadd.f32 %v329, %v330
  %v332 = vsel %vm243, %v308, 0.0
  %v333 = vadd.f32 %v331, %v332
  %v334 = vsel %vm243, %v309, 0.0
  %v335 = vadd.f32 %v333, %v334
  %v336 = vsel %vm243, %v310, 0.0
  %v337 = vadd.f32 %v335, %v336
  %v338 = vsel %vm243, %v311, 0.0
  %v339 = vadd.f32 %v337, %v338
  %v340 = vsel %vm243, %v312, 0.0
  %v341 = vadd.f32 %v339, %v340
  %v342 = vsel %vm243, %v313, 0.0
  %v343 = vadd.f32 %v341, %v342
  %v344 = vsel %vm243, %v314, 0.0
  %v345 = vadd.f32 %v343, %v344
  %v346 = vrot.slane %v345, 4
  %v347 = vadd.f32 %v345, %v346
  %v348 = vrot.slane %v347, 2
  %v349 = vadd.f32 %v347, %v348
  %v350 = vrot.slane %v349, 1
  %v351 = vadd.f32 %v349, %v350
  %352 = vst.msk [vmem:[%s5] sm:$0x1] %vm297, %v351
  // Predicated region
  $region14: #{unet_down_forward.8} parent=0 // pred_check
    _
  $region15: #{unet_down_forward.8} parent=0 // pred_check_branch
    %354 = sbr.rel (0) target = $region17
  $region16: #{unet_down_forward.8} parent=0 // pred_region
    _
  $region17: #{unet_down_forward.8} parent=0 // pred_fallthru
    _
  // Predicated region
  $region18: #{unet_down_forward.8} parent=0 // pred_check
    _
  $region19: #{unet_down_forward.8} parent=0 // pred_check_branch
    %356 = sbr.rel (0) target = $region21
  $region20: #{unet_down_forward.8} parent=0 // pred_region
    _
  $region21: #{unet_down_forward.8} parent=0 // pred_fallthru
    _
  // Predicated region
  $region22: #{unet_down_forward.8} parent=0 // pred_check
    _
  $region23: #{unet_down_forward.8} parent=0 // pred_check_branch
    %358 = sbr.rel (0) target = $region25
  $region24: #{unet_down_forward.8} parent=0 // pred_region
    _
  $region25: #{unet_down_forward.8} parent=0 // pred_fallthru
    _
  // Predicated region
  $region26: #{unet_down_forward.8} parent=0 // pred_check
    _
  $region27: #{unet_down_forward.8} parent=0 // pred_check_branch
    %360 = sbr.rel (0) target = $region29
  $region28: #{unet_down_forward.8} parent=0 // pred_region
    _
  $region29: #{unet_down_forward.8} parent=0 // pred_fallthru
    _
  // Predicated region
  $region30: #{unet_down_forward.8} parent=0 // pred_check
    _
  $region31: #{unet_down_forward.8} parent=0 // pred_check_branch
    %362 = sbr.rel (0) target = $region33
  $region32: #{unet_down_forward.8} parent=0 // pred_region
    _
  $region33: #{unet_down_forward.8} parent=0 // pred_fallthru
    _
  // Predicated region
  $region34: #{unet_down_forward.8} parent=0 // pred_check
    _
  $region35: #{unet_down_forward.8} parent=0 // pred_check_branch
    %364 = sbr.rel (0) target = $region37
  $region36: #{unet_down_forward.8} parent=0 // pred_region
    _
  $region37: #{unet_down_forward.8} parent=0 // pred_fallthru
    _

</llo_original>
